<compile_context>
chip_gen: v5e
topology: v5e:2x2
jax: 0.10.0
libtpu: 0.0.40
codegen_flags: <defaults>
</compile_context>

<pallas_src>
import jax
import jax.numpy as jnp
from jax.experimental import pallas as pl
from jax.experimental.pallas import tpu as pltpu

FIRST_LAYER = 1000
MID_LAYER = 100
BN_EPS = 1e-5
LEAKY_SLOPE = 0.2
LANE = 128
TILE_N = 256          # layer-1 feature tile (d1 = 1024 -> 4 pipelined steps)


def _round_up(n, m):
    return ((n + m - 1) // m) * m


def _leaky_relu(x):
    # max(x, 0.2*x) == LeakyReLU(0.2) since 0 < 0.2 < 1.
    return jnp.maximum(x, LEAKY_SLOPE * x)


def _bn_fold_apply(h, gamma, beta):
    """Training-mode BatchNorm1d folded to per-feature scale/shift, single pass.

    Stats in f32. Padded feature columns are exactly zero -> mu=var=0 there,
    and gamma=0 on padded columns keeps them zero after the affine.
    """
    inv_b = 1.0 / h.shape[0]
    mu = jnp.sum(h, axis=0, keepdims=True) * inv_b
    ex2 = jnp.sum(h * h, axis=0, keepdims=True) * inv_b
    var = ex2 - mu * mu
    scale = gamma * jax.lax.rsqrt(var + BN_EPS)
    shift = beta - mu * scale
    return h * scale + shift


def dense_encoder_kernel(
    x_ref,                      # (B, D0)       f32  (resident; constant block)
    w1_ref, g1_ref, be1_ref,    # (D0, TILE_N) bf16, (1, TILE_N) f32 x2  (pipelined)
    w2_ref,                     # (TILE_N, D2) bf16                      (pipelined)
    g2_ref, be2_ref,            # (1, D2) f32                            (resident)
    wh_ref, bh_ref,             # (D2, DH) bf16, (1, DH) f32             (resident)
    out_ref,                    # (B, DH) f32
    acc_ref,                    # (B, D2) f32 scratch — layer-2 accumulator
):
    i = pl.program_id(0)

    @pl.when(i == 0)
    def _init():
        acc_ref[...] = jnp.zeros_like(acc_ref)

    # ---- Layer-1 tile: Linear (bias cancels in BN) -> BN -> LeakyReLU ----
    h1 = jnp.dot(x_ref[...].astype(jnp.bfloat16), w1_ref[...],
                 preferred_element_type=jnp.float32)
    a1 = _leaky_relu(_bn_fold_apply(h1, g1_ref[...], be1_ref[...]))

    # ---- Layer 2: partial contraction over the feature-tile grid axis ----
    acc_ref[...] += jnp.dot(a1.astype(jnp.bfloat16), w2_ref[...],
                            preferred_element_type=jnp.float32)

    # ---- Final step: BN2 -> LeakyReLU -> fused [mean | log_var] head ----
    @pl.when(i == pl.num_programs(0) - 1)
    def _finalize():
        a2 = _leaky_relu(_bn_fold_apply(acc_ref[...], g2_ref[...], be2_ref[...]))
        out_ref[...] = (
            jnp.dot(a2.astype(jnp.bfloat16), wh_ref[...],
                    preferred_element_type=jnp.float32)
            + bh_ref[...]
        )


def pack_params(p):
    """Pad ragged output-feature dims to lane multiples, fuse heads, cast bf16.

    The contraction (input) dim of w1 is left at its natural width; padded
    gamma/beta columns are zero so padded features stay exactly zero.
    """
    input_dim = p["w1"].shape[0]
    z_dim = p["wm"].shape[1]
    d1 = _round_up(FIRST_LAYER, LANE)      # 1000 -> 1024
    d2 = _round_up(MID_LAYER, LANE)        # 100  -> 128
    dh = _round_up(2 * z_dim, LANE)        # 2*z  -> 128

    def pad2(a, r, c, dtype):
        out = jnp.zeros((r, c), dtype)
        return out.at[: a.shape[0], : a.shape[1]].set(a.astype(dtype))

    wh = jnp.concatenate([p["wm"], p["wv"]], axis=1)   # (100, 2*z_dim)
    bh = jnp.concatenate([p["bm"], p["bv"]], axis=1)   # (1,   2*z_dim)

    packed = dict(
        w1=pad2(p["w1"], input_dim, d1, jnp.bfloat16),
        g1=pad2(p["g1"], 1, d1, jnp.float32),
        be1=pad2(p["be1"], 1, d1, jnp.float32),
        w2=pad2(p["w2"], d1, d2, jnp.bfloat16),
        g2=pad2(p["g2"], 1, d2, jnp.float32),
        be2=pad2(p["be2"], 1, d2, jnp.float32),
        wh=pad2(wh, d2, dh, jnp.bfloat16),
        bh=pad2(bh, 1, dh, jnp.float32),
    )
    return packed, z_dim


def _vmem_limit_bytes(B, input_dim, d1, d2, dh, tile_n):
    """Footprint-derived VMEM limit, capped below physical VMEM per chip gen."""
    bf16, f32 = 2, 4
    bufs = 0
    bufs += 2 * B * input_dim * f32          # x block (double-buffered)
    bufs += 2 * input_dim * tile_n * bf16    # w1 tiles
    bufs += 2 * 2 * tile_n * f32             # gamma1 / beta1 tiles
    bufs += 2 * tile_n * d2 * bf16           # w2 tiles
    bufs += 2 * 2 * d2 * f32                 # gamma2 / beta2
    bufs += 2 * d2 * dh * bf16               # fused head W
    bufs += 2 * dh * f32                     # fused head b
    bufs += 2 * B * dh * f32                 # output block
    bufs += B * d2 * f32                     # accumulator scratch
    bufs += 4 * B * tile_n * f32             # in-flight (B, tile) temporaries
    needed = 2 * bufs + (8 << 20)            # 2x safety + 8 MiB slack
    try:
        cap = int(pltpu.get_tpu_info().vmem_capacity_bytes * 3 // 4)
    except Exception:                        # conservative (v7x-safe) fallback
        cap = 48 << 20
    return int(max(16 << 20, min(needed, cap)))


def dense_encoder_forward(x, packed, z_dim):
    B, input_dim = x.shape
    d1 = packed["w1"].shape[1]
    d2 = packed["w2"].shape[1]
    dh = packed["wh"].shape[1]
    assert d1 % TILE_N == 0
    num_tiles = d1 // TILE_N

    x = x.astype(jnp.float32)   # bf16 cast happens inside the kernel, in VMEM

    args = (
        x,
        packed["w1"], packed["g1"], packed["be1"],
        packed["w2"],
        packed["g2"], packed["be2"],
        packed["wh"], packed["bh"],
    )

    grid_spec = pltpu.PrefetchScalarGridSpec(
        num_scalar_prefetch=0,
        grid=(num_tiles,),
        in_specs=[
            pl.BlockSpec((B, input_dim), lambda i: (0, 0)),       # x (resident)
            pl.BlockSpec((input_dim, TILE_N), lambda i: (0, i)),  # w1 tile
            pl.BlockSpec((1, TILE_N), lambda i: (0, i)),          # gamma1 tile
            pl.BlockSpec((1, TILE_N), lambda i: (0, i)),          # beta1 tile
            pl.BlockSpec((TILE_N, d2), lambda i: (i, 0)),         # w2 tile
            pl.BlockSpec((1, d2), lambda i: (0, 0)),              # gamma2
            pl.BlockSpec((1, d2), lambda i: (0, 0)),              # beta2
            pl.BlockSpec((d2, dh), lambda i: (0, 0)),             # fused head W
            pl.BlockSpec((1, dh), lambda i: (0, 0)),              # fused head b
        ],
        out_specs=pl.BlockSpec((B, dh), lambda i: (0, 0)),
        scratch_shapes=[pltpu.VMEM((B, d2), jnp.float32)],
    )

    out = pl.pallas_call(
        dense_encoder_kernel,
        out_shape=jax.ShapeDtypeStruct((B, dh), jnp.float32),
        grid_spec=grid_spec,
        compiler_params=pltpu.CompilerParams(
            # The feature-tile axis carries the layer-2 accumulator and the
            # output block, so it must stay sequential ("arbitrary").
            dimension_semantics=("arbitrary",),
            vmem_limit_bytes=_vmem_limit_bytes(B, input_dim, d1, d2, dh, TILE_N),
        ),
    )(*args)

    mean = out[:, :z_dim]
    log_var = out[:, z_dim: 2 * z_dim]
    return mean, log_var


def init_params(key, input_dim, z_dim):
    ks = jax.random.split(key, 8)

    def linear(k, fan_in, fan_out):
        kw, kb = jax.random.split(k)
        bound = 1.0 / jnp.sqrt(fan_in)
        w = jax.random.uniform(kw, (fan_in, fan_out), jnp.float32, -bound, bound)
        b = jax.random.uniform(kb, (1, fan_out), jnp.float32, -bound, bound)
        return w, b

    w1, b1 = linear(ks[0], input_dim, FIRST_LAYER)
    w2, b2 = linear(ks[1], FIRST_LAYER, MID_LAYER)
    wm, bm = linear(ks[2], MID_LAYER, z_dim)
    wv, bv = linear(ks[3], MID_LAYER, z_dim)

    # BatchNorm affine params (PyTorch default gamma=1, beta=0); perturbed so
    # they actually matter in the numerical check.
    g1 = 1.0 + 0.01 * jax.random.normal(ks[4], (1, FIRST_LAYER), jnp.float32)
    be1 = 0.01 * jax.random.normal(ks[5], (1, FIRST_LAYER), jnp.float32)
    g2 = 1.0 + 0.01 * jax.random.normal(ks[6], (1, MID_LAYER), jnp.float32)
    be2 = 0.01 * jax.random.normal(ks[7], (1, MID_LAYER), jnp.float32)

    return dict(
        w1=w1, b1=b1, g1=g1, be1=be1,
        w2=w2, b2=b2, g2=g2, be2=be2,
        wm=wm, bm=bm, wv=wv, bv=bv,
    )


def reference_forward(x, p):
    # Pure-JAX reference of the PyTorch module (biases kept; the kernel drops
    # the pre-BN biases which is mathematically equivalent). Matmul operands
    # are cast to bf16 to mirror the kernel's MXU precision.
    def mm(a, w):
        return jnp.dot(a.astype(jnp.bfloat16), w.astype(jnp.bfloat16),
                       preferred_element_type=jnp.float32)

    def bn(h, g, b):
        mu = jnp.mean(h, axis=0, keepdims=True)
        var = jnp.mean((h - mu) ** 2, axis=0, keepdims=True)
        return (h - mu) * jax.lax.rsqrt(var + BN_EPS) * g + b

    a1 = _leaky_relu(bn(mm(x, p["w1"]) + p["b1"], p["g1"], p["be1"]))
    a2 = _leaky_relu(bn(mm(a1, p["w2"]) + p["b2"], p["g2"], p["be2"]))
    return mm(a2, p["wm"]) + p["bm"], mm(a2, p["wv"]) + p["bv"]


if __name__ == "__main__":
    key = jax.random.PRNGKey(0)
    k_x, k_p = jax.random.split(key)

    batch, input_dim, z_dim = 8, 32, 8
    x = jax.random.normal(k_x, (batch, input_dim), jnp.float32)
    params = init_params(k_p, input_dim, z_dim)

    packed, zd = pack_params(params)
    mean, log_var = dense_encoder_forward(x, packed, zd)
    jax.block_until_ready((mean, log_var))

    # Sanity check against pure-JAX reference (bf16 matmul operands in both;
    # tolerance covers accumulation-order / single-pass-variance ULP effects).
    ref_mean, ref_logvar = reference_forward(x, params)
    assert jnp.allclose(mean, ref_mean, atol=1e-2, rtol=1e-2)
    assert jnp.allclose(log_var, ref_logvar, atol=1e-2, rtol=1e-2)

    print("KERNEL_OK")
</pallas_src>

<mosaic_0001>
module attributes {stable_mosaic.version = 11 : i64} {
  func.func @dense_encoder_kernel(%arg0: i32, %arg1: memref<8x32xf32, #tpu.memory_space<vmem>>, %arg2: memref<32x256xbf16, #tpu.memory_space<vmem>>, %arg3: memref<1x256xf32, #tpu.memory_space<vmem>>, %arg4: memref<1x256xf32, #tpu.memory_space<vmem>>, %arg5: memref<256x128xbf16, #tpu.memory_space<vmem>>, %arg6: memref<1x128xf32, #tpu.memory_space<vmem>>, %arg7: memref<1x128xf32, #tpu.memory_space<vmem>>, %arg8: memref<128x128xbf16, #tpu.memory_space<vmem>>, %arg9: memref<1x128xf32, #tpu.memory_space<vmem>>, %arg10: memref<8x128xf32, #tpu.memory_space<vmem>>, %arg11: memref<8x128xf32, #tpu.memory_space<vmem>>) attributes {dimension_semantics = [#tpu.dimension_semantics<arbitrary>], iteration_bounds = array<i64: 4>, scalar_prefetch = 0 : i64, scratch_operands = 1 : i64, tpu.core_type = #tpu.core_type<tc>, window_params = [{pipeline_mode = #tpu.pipeline_mode<synchronous>, transform_indices = @transform_0, window_bounds = array<i64: 8, 32>}, {transform_indices = @transform_1, window_bounds = array<i64: 32, 256>}, {transform_indices = @transform_2, window_bounds = array<i64: 1, 256>}, {transform_indices = @transform_3, window_bounds = array<i64: 1, 256>}, {transform_indices = @transform_4, window_bounds = array<i64: 256, 128>}, {pipeline_mode = #tpu.pipeline_mode<synchronous>, transform_indices = @transform_5, window_bounds = array<i64: 1, 128>}, {pipeline_mode = #tpu.pipeline_mode<synchronous>, transform_indices = @transform_6, window_bounds = array<i64: 1, 128>}, {pipeline_mode = #tpu.pipeline_mode<synchronous>, transform_indices = @transform_7, window_bounds = array<i64: 128, 128>}, {pipeline_mode = #tpu.pipeline_mode<synchronous>, transform_indices = @transform_8, window_bounds = array<i64: 1, 128>}, {pipeline_mode = #tpu.pipeline_mode<synchronous>, transform_indices = @transform_9, window_bounds = array<i64: 8, 128>}]} {
    %c0_i32 = arith.constant 0 : i32
    %0 = arith.cmpi eq, %arg0, %c0_i32 : i32
    %1 = arith.extui %0 : i1 to i32
    %c0_i32_0 = arith.constant 0 : i32
    %2 = arith.cmpi ne, %1, %c0_i32_0 : i32
    scf.if %2 {
      %cst_22 = arith.constant 0.000000e+00 : f32
      %42 = vector.broadcast %cst_22 : f32 to vector<8x128xf32>
      %c0_23 = arith.constant 0 : index
      %c0_24 = arith.constant 0 : index
      %43 = vector.load %arg11[%c0_23, %c0_24] : memref<8x128xf32, #tpu.memory_space<vmem>>, vector<8x128xf32>
      tpu.vector_store %arg11[%c0_23, %c0_24], %42 {strides = array<i32>} : memref<8x128xf32, #tpu.memory_space<vmem>>, vector<8x128xf32>,
    } else {
    }
    %c0 = arith.constant 0 : index
    %c0_1 = arith.constant 0 : index
    %3 = vector.load %arg1[%c0, %c0_1] : memref<8x32xf32, #tpu.memory_space<vmem>>, vector<8x32xf32>
    %4 = arith.truncf %3 : vector<8x32xf32> to vector<8x32xbf16>
    %c0_2 = arith.constant 0 : index
    %c0_3 = arith.constant 0 : index
    %5 = vector.load %arg2[%c0_2, %c0_3] : memref<32x256xbf16, #tpu.memory_space<vmem>>, vector<32x256xbf16>
    %cst = arith.constant dense<0.000000e+00> : vector<8x256xf32>
    %6 = tpu.matmul %4, %5, %cst {dimension_numbers = #tpu.dot_dimension_numbers<[1], [0], [0], [1], [0, 0, 1, 1], [], []>} : vector<8x32xbf16>, vector<32x256xbf16>, vector<8x256xf32> -> vector<8x256xf32>
    %c0_4 = arith.constant 0 : index
    %c0_5 = arith.constant 0 : index
    %7 = vector.load %arg3[%c0_4, %c0_5] : memref<1x256xf32, #tpu.memory_space<vmem>>, vector<1x256xf32>
    %c0_6 = arith.constant 0 : index
    %c0_7 = arith.constant 0 : index
    %8 = vector.load %arg4[%c0_6, %c0_7] : memref<1x256xf32, #tpu.memory_space<vmem>>, vector<1x256xf32>
    %cst_8 = arith.constant dense<0.000000e+00> : vector<256xf32>
    %9 = vector.multi_reduction <add>, %6, %cst_8 [0] : vector<8x256xf32> to vector<256xf32>
    %10 = vector.shape_cast %9 : vector<256xf32> to vector<1x256xf32>
    %cst_9 = arith.constant 1.250000e-01 : f32
    %11 = vector.broadcast %cst_9 : f32 to vector<1x256xf32>
    %12 = arith.mulf %10, %11 : vector<1x256xf32>
    %13 = arith.mulf %6, %6 : vector<8x256xf32>
    %cst_10 = arith.constant dense<0.000000e+00> : vector<256xf32>
    %14 = vector.multi_reduction <add>, %13, %cst_10 [0] : vector<8x256xf32> to vector<256xf32>
    %15 = vector.shape_cast %14 : vector<256xf32> to vector<1x256xf32>
    %cst_11 = arith.constant 1.250000e-01 : f32
    %16 = vector.broadcast %cst_11 : f32 to vector<1x256xf32>
    %17 = arith.mulf %15, %16 : vector<1x256xf32>
    %18 = arith.mulf %12, %12 : vector<1x256xf32>
    %19 = arith.subf %17, %18 : vector<1x256xf32>
    %cst_12 = arith.constant 9.99999974E-6 : f32
    %20 = vector.broadcast %cst_12 : f32 to vector<1x256xf32>
    %21 = arith.addf %19, %20 : vector<1x256xf32>
    %22 = math.rsqrt %21 : vector<1x256xf32>
    %23 = arith.mulf %7, %22 : vector<1x256xf32>
    %24 = arith.mulf %12, %23 : vector<1x256xf32>
    %25 = arith.subf %8, %24 : vector<1x256xf32>
    %26 = vector.broadcast %23 : vector<1x256xf32> to vector<8x256xf32>
    %27 = arith.mulf %6, %26 : vector<8x256xf32>
    %28 = vector.broadcast %25 : vector<1x256xf32> to vector<8x256xf32>
    %29 = arith.addf %27, %28 : vector<8x256xf32>
    %cst_13 = arith.constant 2.000000e-01 : f32
    %30 = vector.broadcast %cst_13 : f32 to vector<8x256xf32>
    %31 = arith.mulf %30, %29 : vector<8x256xf32>
    %32 = arith.maximumf %29, %31 : vector<8x256xf32>
    %c0_14 = arith.constant 0 : index
    %c0_15 = arith.constant 0 : index
    %33 = vector.load %arg11[%c0_14, %c0_15] : memref<8x128xf32, #tpu.memory_space<vmem>>, vector<8x128xf32>
    %34 = arith.truncf %32 : vector<8x256xf32> to vector<8x256xbf16>
    %c0_16 = arith.constant 0 : index
    %c0_17 = arith.constant 0 : index
    %35 = vector.load %arg5[%c0_16, %c0_17] : memref<256x128xbf16, #tpu.memory_space<vmem>>, vector<256x128xbf16>
    %cst_18 = arith.constant dense<0.000000e+00> : vector<8x128xf32>
    %36 = tpu.matmul %34, %35, %cst_18 {dimension_numbers = #tpu.dot_dimension_numbers<[1], [0], [0], [1], [0, 0, 1, 1], [], []>} : vector<8x256xbf16>, vector<256x128xbf16>, vector<8x128xf32> -> vector<8x128xf32>
    %37 = arith.addf %33, %36 : vector<8x128xf32>
    %c0_19 = arith.constant 0 : index
    %c0_20 = arith.constant 0 : index
    %38 = vector.load %arg11[%c0_19, %c0_20] : memref<8x128xf32, #tpu.memory_space<vmem>>, vector<8x128xf32>
    tpu.vector_store %arg11[%c0_19, %c0_20], %37 {strides = array<i32>} : memref<8x128xf32, #tpu.memory_space<vmem>>, vector<8x128xf32>,
    %c3_i32 = arith.constant 3 : i32
    %39 = arith.cmpi eq, %arg0, %c3_i32 : i32
    %40 = arith.extui %39 : i1 to i32
    %c0_i32_21 = arith.constant 0 : i32
    %41 = arith.cmpi ne, %40, %c0_i32_21 : i32
    scf.if %41 {
      %c0_22 = arith.constant 0 : index
      %c0_23 = arith.constant 0 : index
      %42 = vector.load %arg11[%c0_22, %c0_23] : memref<8x128xf32, #tpu.memory_space<vmem>>, vector<8x128xf32>
      %c0_24 = arith.constant 0 : index
      %c0_25 = arith.constant 0 : index
      %43 = vector.load %arg6[%c0_24, %c0_25] : memref<1x128xf32, #tpu.memory_space<vmem>>, vector<1x128xf32>
      %c0_26 = arith.constant 0 : index
      %c0_27 = arith.constant 0 : index
      %44 = vector.load %arg7[%c0_26, %c0_27] : memref<1x128xf32, #tpu.memory_space<vmem>>, vector<1x128xf32>
      %cst_28 = arith.constant dense<0.000000e+00> : vector<128xf32>
      %45 = vector.multi_reduction <add>, %42, %cst_28 [0] : vector<8x128xf32> to vector<128xf32>
      %46 = vector.shape_cast %45 : vector<128xf32> to vector<1x128xf32>
      %cst_29 = arith.constant 1.250000e-01 : f32
      %47 = vector.broadcast %cst_29 : f32 to vector<1x128xf32>
      %48 = arith.mulf %46, %47 : vector<1x128xf32>
      %49 = arith.mulf %42, %42 : vector<8x128xf32>
      %cst_30 = arith.constant dense<0.000000e+00> : vector<128xf32>
      %50 = vector.multi_reduction <add>, %49, %cst_30 [0] : vector<8x128xf32> to vector<128xf32>
      %51 = vector.shape_cast %50 : vector<128xf32> to vector<1x128xf32>
      %cst_31 = arith.constant 1.250000e-01 : f32
      %52 = vector.broadcast %cst_31 : f32 to vector<1x128xf32>
      %53 = arith.mulf %51, %52 : vector<1x128xf32>
      %54 = arith.mulf %48, %48 : vector<1x128xf32>
      %55 = arith.subf %53, %54 : vector<1x128xf32>
      %cst_32 = arith.constant 9.99999974E-6 : f32
      %56 = vector.broadcast %cst_32 : f32 to vector<1x128xf32>
      %57 = arith.addf %55, %56 : vector<1x128xf32>
      %58 = math.rsqrt %57 : vector<1x128xf32>
      %59 = arith.mulf %43, %58 : vector<1x128xf32>
      %60 = arith.mulf %48, %59 : vector<1x128xf32>
      %61 = arith.subf %44, %60 : vector<1x128xf32>
      %62 = vector.broadcast %59 : vector<1x128xf32> to vector<8x128xf32>
      %63 = arith.mulf %42, %62 : vector<8x128xf32>
      %64 = vector.broadcast %61 : vector<1x128xf32> to vector<8x128xf32>
      %65 = arith.addf %63, %64 : vector<8x128xf32>
      %cst_33 = arith.constant 2.000000e-01 : f32
      %66 = vector.broadcast %cst_33 : f32 to vector<8x128xf32>
      %67 = arith.mulf %66, %65 : vector<8x128xf32>
      %68 = arith.maximumf %65, %67 : vector<8x128xf32>
      %69 = arith.truncf %68 : vector<8x128xf32> to vector<8x128xbf16>
      %c0_34 = arith.constant 0 : index
      %c0_35 = arith.constant 0 : index
      %70 = vector.load %arg8[%c0_34, %c0_35] : memref<128x128xbf16, #tpu.memory_space<vmem>>, vector<128x128xbf16>
      %cst_36 = arith.constant dense<0.000000e+00> : vector<8x128xf32>
      %71 = tpu.matmul %69, %70, %cst_36 {dimension_numbers = #tpu.dot_dimension_numbers<[1], [0], [0], [1], [0, 0, 1, 1], [], []>} : vector<8x128xbf16>, vector<128x128xbf16>, vector<8x128xf32> -> vector<8x128xf32>
      %c0_37 = arith.constant 0 : index
      %c0_38 = arith.constant 0 : index
      %72 = vector.load %arg9[%c0_37, %c0_38] : memref<1x128xf32, #tpu.memory_space<vmem>>, vector<1x128xf32>
      %73 = vector.broadcast %72 : vector<1x128xf32> to vector<8x128xf32>
      %74 = arith.addf %71, %73 : vector<8x128xf32>
      %c0_39 = arith.constant 0 : index
      %c0_40 = arith.constant 0 : index
      %75 = vector.load %arg10[%c0_39, %c0_40] : memref<8x128xf32, #tpu.memory_space<vmem>>, vector<8x128xf32>
      tpu.vector_store %arg10[%c0_39, %c0_40], %74 {strides = array<i32>} : memref<8x128xf32, #tpu.memory_space<vmem>>, vector<8x128xf32>,
    } else {
    }
    return
  }
  func.func @transform_0(%arg0: i32) -> (i32, i32) {
    %c0_i32 = arith.constant 0 : i32
    %c0_i32_0 = arith.constant 0 : i32
    %c0_i32_1 = arith.constant 0 : i32
    return %c0_i32, %c0_i32_0 : i32, i32
  }
  func.func @transform_1(%arg0: i32) -> (i32, i32) {
    %c0_i32 = arith.constant 0 : i32
    %c0_i32_0 = arith.constant 0 : i32
    return %c0_i32, %arg0 : i32, i32
  }
  func.func @transform_2(%arg0: i32) -> (i32, i32) {
    %c0_i32 = arith.constant 0 : i32
    %c0_i32_0 = arith.constant 0 : i32
    return %c0_i32, %arg0 : i32, i32
  }
  func.func @transform_3(%arg0: i32) -> (i32, i32) {
    %c0_i32 = arith.constant 0 : i32
    %c0_i32_0 = arith.constant 0 : i32
    return %c0_i32, %arg0 : i32, i32
  }
  func.func @transform_4(%arg0: i32) -> (i32, i32) {
    %c0_i32 = arith.constant 0 : i32
    %c0_i32_0 = arith.constant 0 : i32
    return %arg0, %c0_i32 : i32, i32
  }
  func.func @transform_5(%arg0: i32) -> (i32, i32) {
    %c0_i32 = arith.constant 0 : i32
    %c0_i32_0 = arith.constant 0 : i32
    %c0_i32_1 = arith.constant 0 : i32
    return %c0_i32, %c0_i32_0 : i32, i32
  }
  func.func @transform_6(%arg0: i32) -> (i32, i32) {
    %c0_i32 = arith.constant 0 : i32
    %c0_i32_0 = arith.constant 0 : i32
    %c0_i32_1 = arith.constant 0 : i32
    return %c0_i32, %c0_i32_0 : i32, i32
  }
  func.func @transform_7(%arg0: i32) -> (i32, i32) {
    %c0_i32 = arith.constant 0 : i32
    %c0_i32_0 = arith.constant 0 : i32
    %c0_i32_1 = arith.constant 0 : i32
    return %c0_i32, %c0_i32_0 : i32, i32
  }
  func.func @transform_8(%arg0: i32) -> (i32, i32) {
    %c0_i32 = arith.constant 0 : i32
    %c0_i32_0 = arith.constant 0 : i32
    %c0_i32_1 = arith.constant 0 : i32
    return %c0_i32, %c0_i32_0 : i32, i32
  }
  func.func @transform_9(%arg0: i32) -> (i32, i32) {
    %c0_i32 = arith.constant 0 : i32
    %c0_i32_0 = arith.constant 0 : i32
    %c0_i32_1 = arith.constant 0 : i32
    return %c0_i32, %c0_i32_0 : i32, i32
  }
}

</mosaic_0001>

<llo_original>
// kernel: tpu_custom_call.1
$region0: #{tpu_custom_call.1}
  #allocation0 [shape = 'u32[]', space=smem, size = 0x4, offset = 0x4, fixed_abs, tag = 'smem constant byte address 0x4 - core index']
  #allocation1 [shape = 'u32[72,128]{1,0:T(1,128)}', space=vmem, size = 0x9000, scoped, tag = 'internal scratch']
  #allocation2 [shape = 'f32[8,128]{1,0:T(8,128)}', space=vmem, size = 0x1000, scoped, tag = 'scratch operand']
  %s0 = inlined_call_operand.hbm [shape: f32[8,32], index: 0, kind: input, shape index: {}]
  %s1 = inlined_call_operand.hbm [shape: bf16[32,1024], index: 1, kind: input, shape index: {}]
  %s2 = inlined_call_operand.hbm [shape: f32[1,1024], index: 2, kind: input, shape index: {}]
  %s3 = inlined_call_operand.hbm [shape: f32[1,1024], index: 3, kind: input, shape index: {}]
  %s4 = inlined_call_operand.hbm [shape: bf16[1024,128], index: 4, kind: input, shape index: {}]
  %s5 = inlined_call_operand.vmem [shape: f32[1,128], index: 5, kind: input, shape index: {}]
  %s6 = inlined_call_operand.vmem [shape: f32[1,128], index: 6, kind: input, shape index: {}]
  %s7 = inlined_call_operand.hbm [shape: bf16[128,128], index: 7, kind: input, shape index: {}]
  %s8 = inlined_call_operand.vmem [shape: f32[1,128], index: 8, kind: input, shape index: {}]
  %s9 = inlined_call_operand.hbm [shape: f32[8,128], index: 9, kind: output, shape index: {}]
  %s10 = sld [smem:[#allocation0]]
  $region101: #{tpu_custom_call.1} parent=0
    _
  %s12 = ssub.s32 1, %s10
  %s13 = scalar_select 0, %s12, %s10
  $region1: #{tpu_custom_call.1} parent=0
    #allocation3 [shape = 'u8[4096]{0}', space=vmem, size = 0x1000, scoped, tag = 'input window, operand 0, single buffered']
    #allocation4 [shape = 's32[2]{0}', space=sflag, size = 0x8, scoped, tag = 'scoped memory for tpu_custom_call.1']
    #allocation5 [shape = 's32[2]{0}', space=sflag, size = 0x8, scoped, tag = 'scoped memory for tpu_custom_call.1']
    #allocation6 [shape = 'u8[32768]{0}', space=vmem, size = 0x8000, scoped, tag = 'input window, operand 1']
    #allocation7 [shape = 's32[2]{0}', space=sflag, size = 0x8, scoped, tag = 'scoped memory for tpu_custom_call.1']
    #allocation8 [shape = 'u8[2048]{0}', space=vmem, size = 0x800, scoped, tag = 'input window, operand 2']
    #allocation9 [shape = 'u8[2048]{0}', space=vmem, size = 0x800, scoped, tag = 'input window, operand 3']
    #allocation10 [shape = 's32[2]{0}', space=sflag, size = 0x8, scoped, tag = 'scoped memory for tpu_custom_call.1']
    #allocation11 [shape = 'u8[131072]{0}', space=vmem, size = 0x20000, scoped, tag = 'input window, operand 4']
    #allocation12 [shape = 'u8[32768]{0}', space=vmem, size = 0x8000, scoped, tag = 'input window, operand 7, single buffered']
    #allocation13 [shape = 's32[1]{0}', space=sflag, size = 0x4, scoped, tag = 'scoped memory for tpu_custom_call.1']
    #allocation14 [shape = 'u8[4096]{0}', space=vmem, size = 0x1000, scoped, tag = 'output window, operand 0, single buffered']
    %14 = vsyncpa [#allocation4], 0
    %15 = vsyncpa [#allocation7], 0
    %s16 = scalar_lea.sflag [#allocation7], 1
    %17 = vsyncpa %s16, 0
    %18 = vsyncpa [#allocation10], 0
    %s19 = scalar_lea.sflag [#allocation10], 1
    %20 = vsyncpa %s19, 0
    %21 = vsyncpa [#allocation13], 0
    %22 = vsyncpa [#allocation5], 0
    loop: start=0, step=1, limit=6
    $region2: #{tpu_custom_call.1} parent=1 // loop_pre_header
      _
    $region3: #{tpu_custom_call.1} parent=1 // loop_header
      %s24 = sphi 0, %s28
      %p25 = scmp.ge.s32.totalorder %s24, 6
      %s32 = sphi 0, %s32
      %s34 = sphi 0, %s32
      %s35 = sphi 0, %s34
      %s49 = sphi 0, %s35
      %s55 = sphi 0, %s57
      %s58 = sphi 0, %s55
      %s59 = sphi 0, %s58
      %s75 = sphi 0, %s59
      %s81 = sphi 0, %s83
      %s84 = sphi 0, %s81
      %s85 = sphi 0, %s84
      %s101 = sphi 0, %s85
      %s107 = sphi 0, %s109
      %s110 = sphi 0, %s107
      %s111 = sphi 0, %s110
      %s127 = sphi 0, %s111
      %s133 = sphi 0, %s135
      %s136 = sphi 0, %s133
      %s137 = sphi 0, %s136
      %s153 = sphi 0, %s137
      %s157 = sphi 0, %s157
      %s159 = sphi 0, %s157
      %s160 = sphi 0, %s159
      %s174 = sphi 0, %s160
      %s178 = sphi 0, %s178
      %s180 = sphi 0, %s178
      %s181 = sphi 0, %s180
      %s195 = sphi 0, %s181
      %s199 = sphi 0, %s199
      %s201 = sphi 0, %s199
      %s202 = sphi 0, %s201
      %s216 = sphi 0, %s202
      %s220 = sphi 0, %s220
      %s222 = sphi 0, %s220
      %s223 = sphi 0, %s222
      %s237 = sphi 0, %s223
      %s241 = sphi 0, %s241
      %s243 = sphi 0, %s241
      %s244 = sphi 0, %s243
      %s258 = sphi 0, %s244
    $region4: #{tpu_custom_call.1} parent=1 // loop_header_branch
      %27 = sbr.rel (%p25) target = $region8
    $region5: #{tpu_custom_call.1} parent=1 // loop_body
      %s29 = ssub.s32 %s24, 1
      %s30 = ssub.s32 %s24, 2
      %s31 = sadd.s32 %s24, 1
      %s33 = sadd.s32 %s32, 1
      %p36 = scmp.eq.s32.totalorder %s24, 3
      %p37 = scmp.ne.s32.totalorder %s32, %s34
      %p38 = scmp.eq.s32.totalorder %s24, 0
      %p39 = por %p37, %p38
      %p40 = scmp.ne.s32.totalorder %s32, %s34
      %p41 = scmp.eq.s32.totalorder %s29, 3
      %p42 = por %p40, %p41
      %p43 = scmp.ne.s32.totalorder %s34, %s35
      %p44 = scmp.eq.s32.totalorder %s29, 0
      %p45 = por %p43, %p44
      %p46 = scmp.ne.s32.totalorder %s34, %s35
      %p47 = scmp.eq.s32.totalorder %s30, 3
      %p48 = por %p46, %p47
      %p50 = scmp.ne.s32.totalorder %s35, %s49
      %p51 = scmp.eq.s32.totalorder %s30, 0
      %p52 = por %p50, %p51
      %s53 = ssub.s32 %s24, %s31
      %p54 = scmp.eq.s32.totalorder %s53, 0
      %s56 = sadd.s32 %s55, 1
      %s57 = scalar_select %p54, %s55, %s56
      %p60 = pneg %p54
      %p61 = scmp.eq.s32.totalorder %s24, 3
      %p62 = por %p60, %p61
      %p63 = scmp.ne.s32.totalorder %s55, %s58
      %p64 = scmp.eq.s32.totalorder %s24, 0
      %p65 = por %p63, %p64
      %p66 = scmp.ne.s32.totalorder %s55, %s58
      %p67 = scmp.eq.s32.totalorder %s29, 3
      %p68 = por %p66, %p67
      %p69 = scmp.ne.s32.totalorder %s58, %s59
      %p70 = scmp.eq.s32.totalorder %s29, 0
      %p71 = por %p69, %p70
      %p72 = scmp.ne.s32.totalorder %s58, %s59
      %p73 = scmp.eq.s32.totalorder %s30, 3
      %p74 = por %p72, %p73
      %p76 = scmp.ne.s32.totalorder %s59, %s75
      %p77 = scmp.eq.s32.totalorder %s30, 0
      %p78 = por %p76, %p77
      %s79 = ssub.s32 %s24, %s31
      %p80 = scmp.eq.s32.totalorder %s79, 0
      %s82 = sadd.s32 %s81, 1
      %s83 = scalar_select %p80, %s81, %s82
      %p86 = pneg %p80
      %p87 = scmp.eq.s32.totalorder %s24, 3
      %p88 = por %p86, %p87
      %p89 = scmp.ne.s32.totalorder %s81, %s84
      %p90 = scmp.eq.s32.totalorder %s24, 0
      %p91 = por %p89, %p90
      %p92 = scmp.ne.s32.totalorder %s81, %s84
      %p93 = scmp.eq.s32.totalorder %s29, 3
      %p94 = por %p92, %p93
      %p95 = scmp.ne.s32.totalorder %s84, %s85
      %p96 = scmp.eq.s32.totalorder %s29, 0
      %p97 = por %p95, %p96
      %p98 = scmp.ne.s32.totalorder %s84, %s85
      %p99 = scmp.eq.s32.totalorder %s30, 3
      %p100 = por %p98, %p99
      %p102 = scmp.ne.s32.totalorder %s85, %s101
      %p103 = scmp.eq.s32.totalorder %s30, 0
      %p104 = por %p102, %p103
      %s105 = ssub.s32 %s24, %s31
      %p106 = scmp.eq.s32.totalorder %s105, 0
      %s108 = sadd.s32 %s107, 1
      %s109 = scalar_select %p106, %s107, %s108
      %p112 = pneg %p106
      %p113 = scmp.eq.s32.totalorder %s24, 3
      %p114 = por %p112, %p113
      %p115 = scmp.ne.s32.totalorder %s107, %s110
      %p116 = scmp.eq.s32.totalorder %s24, 0
      %p117 = por %p115, %p116
      %p118 = scmp.ne.s32.totalorder %s107, %s110
      %p119 = scmp.eq.s32.totalorder %s29, 3
      %p120 = por %p118, %p119
      %p121 = scmp.ne.s32.totalorder %s110, %s111
      %p122 = scmp.eq.s32.totalorder %s29, 0
      %p123 = por %p121, %p122
      %p124 = scmp.ne.s32.totalorder %s110, %s111
      %p125 = scmp.eq.s32.totalorder %s30, 3
      %p126 = por %p124, %p125
      %p128 = scmp.ne.s32.totalorder %s111, %s127
      %p129 = scmp.eq.s32.totalorder %s30, 0
      %p130 = por %p128, %p129
      %s131 = ssub.s32 %s24, %s31
      %p132 = scmp.eq.s32.totalorder %s131, 0
      %s134 = sadd.s32 %s133, 1
      %s135 = scalar_select %p132, %s133, %s134
      %p138 = pneg %p132
      %p139 = scmp.eq.s32.totalorder %s24, 3
      %p140 = por %p138, %p139
      %p141 = scmp.ne.s32.totalorder %s133, %s136
      %p142 = scmp.eq.s32.totalorder %s24, 0
      %p143 = por %p141, %p142
      %p144 = scmp.ne.s32.totalorder %s133, %s136
      %p145 = scmp.eq.s32.totalorder %s29, 3
      %p146 = por %p144, %p145
      %p147 = scmp.ne.s32.totalorder %s136, %s137
      %p148 = scmp.eq.s32.totalorder %s29, 0
      %p149 = por %p147, %p148
      %p150 = scmp.ne.s32.totalorder %s136, %s137
      %p151 = scmp.eq.s32.totalorder %s30, 3
      %p152 = por %p150, %p151
      %p154 = scmp.ne.s32.totalorder %s137, %s153
      %p155 = scmp.eq.s32.totalorder %s30, 0
      %p156 = por %p154, %p155
      %s158 = sadd.s32 %s157, 1
      %p161 = scmp.eq.s32.totalorder %s24, 3
      %p162 = scmp.ne.s32.totalorder %s157, %s159
      %p163 = scmp.eq.s32.totalorder %s24, 0
      %p164 = por %p162, %p163
      %p165 = scmp.ne.s32.totalorder %s157, %s159
      %p166 = scmp.eq.s32.totalorder %s29, 3
      %p167 = por %p165, %p166
      %p168 = scmp.ne.s32.totalorder %s159, %s160
      %p169 = scmp.eq.s32.totalorder %s29, 0
      %p170 = por %p168, %p169
      %p171 = scmp.ne.s32.totalorder %s159, %s160
      %p172 = scmp.eq.s32.totalorder %s30, 3
      %p173 = por %p171, %p172
      %p175 = scmp.ne.s32.totalorder %s160, %s174
      %p176 = scmp.eq.s32.totalorder %s30, 0
      %p177 = por %p175, %p176
      %s179 = sadd.s32 %s178, 1
      %p182 = scmp.eq.s32.totalorder %s24, 3
      %p183 = scmp.ne.s32.totalorder %s178, %s180
      %p184 = scmp.eq.s32.totalorder %s24, 0
      %p185 = por %p183, %p184
      %p186 = scmp.ne.s32.totalorder %s178, %s180
      %p187 = scmp.eq.s32.totalorder %s29, 3
      %p188 = por %p186, %p187
      %p189 = scmp.ne.s32.totalorder %s180, %s181
      %p190 = scmp.eq.s32.totalorder %s29, 0
      %p191 = por %p189, %p190
      %p192 = scmp.ne.s32.totalorder %s180, %s181
      %p193 = scmp.eq.s32.totalorder %s30, 3
      %p194 = por %p192, %p193
      %p196 = scmp.ne.s32.totalorder %s181, %s195
      %p197 = scmp.eq.s32.totalorder %s30, 0
      %p198 = por %p196, %p197
      %s200 = sadd.s32 %s199, 1
      %p203 = scmp.eq.s32.totalorder %s24, 3
      %p204 = scmp.ne.s32.totalorder %s199, %s201
      %p205 = scmp.eq.s32.totalorder %s24, 0
      %p206 = por %p204, %p205
      %p207 = scmp.ne.s32.totalorder %s199, %s201
      %p208 = scmp.eq.s32.totalorder %s29, 3
      %p209 = por %p207, %p208
      %p210 = scmp.ne.s32.totalorder %s201, %s202
      %p211 = scmp.eq.s32.totalorder %s29, 0
      %p212 = por %p210, %p211
      %p213 = scmp.ne.s32.totalorder %s201, %s202
      %p214 = scmp.eq.s32.totalorder %s30, 3
      %p215 = por %p213, %p214
      %p217 = scmp.ne.s32.totalorder %s202, %s216
      %p218 = scmp.eq.s32.totalorder %s30, 0
      %p219 = por %p217, %p218
      %s221 = sadd.s32 %s220, 1
      %p224 = scmp.eq.s32.totalorder %s24, 3
      %p225 = scmp.ne.s32.totalorder %s220, %s222
      %p226 = scmp.eq.s32.totalorder %s24, 0
      %p227 = por %p225, %p226
      %p228 = scmp.ne.s32.totalorder %s220, %s222
      %p229 = scmp.eq.s32.totalorder %s29, 3
      %p230 = por %p228, %p229
      %p231 = scmp.ne.s32.totalorder %s222, %s223
      %p232 = scmp.eq.s32.totalorder %s29, 0
      %p233 = por %p231, %p232
      %p234 = scmp.ne.s32.totalorder %s222, %s223
      %p235 = scmp.eq.s32.totalorder %s30, 3
      %p236 = por %p234, %p235
      %p238 = scmp.ne.s32.totalorder %s223, %s237
      %p239 = scmp.eq.s32.totalorder %s30, 0
      %p240 = por %p238, %p239
      %s242 = sadd.s32 %s241, 1
      %p245 = scmp.eq.s32.totalorder %s24, 3
      %p246 = scmp.ne.s32.totalorder %s241, %s243
      %p247 = scmp.eq.s32.totalorder %s24, 0
      %p248 = por %p246, %p247
      %p249 = scmp.ne.s32.totalorder %s241, %s243
      %p250 = scmp.eq.s32.totalorder %s29, 3
      %p251 = por %p249, %p250
      %p252 = scmp.ne.s32.totalorder %s243, %s244
      %p253 = scmp.eq.s32.totalorder %s29, 0
      %p254 = por %p252, %p253
      %p255 = scmp.ne.s32.totalorder %s243, %s244
      %p256 = scmp.eq.s32.totalorder %s30, 3
      %p257 = por %p255, %p256
      %p259 = scmp.ne.s32.totalorder %s244, %s258
      %p260 = scmp.eq.s32.totalorder %s30, 0
      %p261 = por %p259, %p260
      %p262 = scmp.le.s32.totalorder 1, %s24
      %p263 = scmp.lt.s32.totalorder %s24, 5
      %p264 = pnand %p262, %p263
      %p265 = pneg %p264
      // Predicated region
      $region9: #{tpu_custom_call.1} parent=5 // pred_check
        _
      $region10: #{tpu_custom_call.1} parent=5 // pred_check_branch
        %267 = sbr.rel (%p264) target = $region12
      $region11: #{tpu_custom_call.1} parent=5 // pred_region
        %s268 = ssub.s32 %s24, 1
        // Predicated region
        $region13: #{tpu_custom_call.1} parent=11 // pred_check
          %p269 = pneg %p45
        $region14: #{tpu_custom_call.1} parent=11 // pred_check_branch
          %271 = sbr.rel (%p269) target = $region16
        $region15: #{tpu_custom_call.1} parent=11 // pred_region
          %273 = vsyncadd [#allocation4], 0
          %s275 = sshll.u32 %s0, 4
          %s276 = int_to_ptr.hbm [resolvable:$true] %s275
          %s277 = sshll.u32 [#allocation3], 4
          %s278 = int_to_ptr.vmem [resolvable:$true] %s277
          %280 = dma.hbm_to_vmem [thread:$0]  %s276, 128, %s278, [#allocation4]
        $region16: #{tpu_custom_call.1} parent=11 // pred_fallthru
          _
        // Predicated region
        $region17: #{tpu_custom_call.1} parent=11 // pred_check
          %p281 = pneg %p170
        $region18: #{tpu_custom_call.1} parent=11 // pred_check_branch
          %283 = sbr.rel (%p281) target = $region20
        $region19: #{tpu_custom_call.1} parent=11 // pred_region
          _
        $region20: #{tpu_custom_call.1} parent=11 // pred_fallthru
          _
        // Predicated region
        $region21: #{tpu_custom_call.1} parent=11 // pred_check
          %p284 = pneg %p191
        $region22: #{tpu_custom_call.1} parent=11 // pred_check_branch
          %286 = sbr.rel (%p284) target = $region24
        $region23: #{tpu_custom_call.1} parent=11 // pred_region
          _
        $region24: #{tpu_custom_call.1} parent=11 // pred_fallthru
          _
        // Predicated region
        $region25: #{tpu_custom_call.1} parent=11 // pred_check
          %p287 = pneg %p212
        $region26: #{tpu_custom_call.1} parent=11 // pred_check_branch
          %289 = sbr.rel (%p287) target = $region28
        $region27: #{tpu_custom_call.1} parent=11 // pred_region
          %291 = vsyncadd [#allocation13], 0
          %s292 = sshll.u32 %s7, 4
          %s293 = int_to_ptr.hbm [resolvable:$true] %s292
          %s294 = sshll.u32 [#allocation12], 4
          %s295 = int_to_ptr.vmem [resolvable:$true] %s294
          %300 = dma.hbm_to_vmem [thread:$0]  %s293, 1024, %s295, [#allocation13], 64, 64, 4
        $region28: #{tpu_custom_call.1} parent=11 // pred_fallthru
          _
        // Predicated region
        $region29: #{tpu_custom_call.1} parent=11 // pred_check
          %p301 = pneg %p233
        $region30: #{tpu_custom_call.1} parent=11 // pred_check_branch
          %303 = sbr.rel (%p301) target = $region32
        $region31: #{tpu_custom_call.1} parent=11 // pred_region
          _
        $region32: #{tpu_custom_call.1} parent=11 // pred_fallthru
          _
      $region12: #{tpu_custom_call.1} parent=5 // pred_fallthru
        _
      %p304 = scmp.lt.s32.totalorder %s24, 4
      // Predicated region
      $region33: #{tpu_custom_call.1} parent=5 // pred_check
        %p305 = pneg %p304
      $region34: #{tpu_custom_call.1} parent=5 // pred_check_branch
        %307 = sbr.rel (%p305) target = $region36
      $region35: #{tpu_custom_call.1} parent=5 // pred_region
        // Predicated region
        $region37: #{tpu_custom_call.1} parent=35 // pred_check
          %p308 = pneg %p65
        $region38: #{tpu_custom_call.1} parent=35 // pred_check_branch
          %310 = sbr.rel (%p308) target = $region40
        $region39: #{tpu_custom_call.1} parent=35 // pred_region
          %s311 = sand.u32 %s24, 1
          %s312 = scalar_lea.sflag [#allocation7], %s311
          %s313 = sand.u32 %s55, 1
          %s314 = smul.addr %s313, 32
          %s315 = scalar_lea.vmem [#allocation6], %s314
          %s316 = smul.u32 2, %s24
          %318 = vsyncadd %s312, 0
          %s319 = smul.addr %s316, 4
          %s320 = scalar_lea.hbm %s1, %s319
          %s321 = sshll.u32 %s320, 4
          %s322 = int_to_ptr.hbm [resolvable:$true] %s321
          %s323 = sshll.u32 %s315, 4
          %s324 = int_to_ptr.vmem [resolvable:$true] %s323
          %329 = dma.hbm_to_vmem [thread:$0]  %s322, 512, %s324, %s312, 512, 128, 8
        $region40: #{tpu_custom_call.1} parent=35 // pred_fallthru
          _
        // Predicated region
        $region41: #{tpu_custom_call.1} parent=35 // pred_check
          %p330 = pneg %p91
        $region42: #{tpu_custom_call.1} parent=35 // pred_check_branch
          %332 = sbr.rel (%p330) target = $region44
        $region43: #{tpu_custom_call.1} parent=35 // pred_region
          %s333 = sand.u32 %s24, 1
          %s334 = scalar_lea.sflag [#allocation7], %s333
          %s335 = sand.u32 %s81, 1
          %s336 = smul.addr %s335, 2
          %s337 = scalar_lea.vmem [#allocation8], %s336
          %s338 = smul.u32 2, %s24
          %340 = vsyncadd %s334, 0
          %s341 = scalar_lea.hbm %s2, %s338
          %s343 = sshll.u32 %s341, 4
          %s344 = int_to_ptr.hbm [resolvable:$true] %s343
          %s345 = sshll.u32 %s337, 4
          %s346 = int_to_ptr.vmem [resolvable:$true] %s345
          %348 = dma.hbm_to_vmem [thread:$0]  %s344, 32, %s346, %s334
        $region44: #{tpu_custom_call.1} parent=35 // pred_fallthru
          _
        // Predicated region
        $region45: #{tpu_custom_call.1} parent=35 // pred_check
          %p349 = pneg %p117
        $region46: #{tpu_custom_call.1} parent=35 // pred_check_branch
          %351 = sbr.rel (%p349) target = $region48
        $region47: #{tpu_custom_call.1} parent=35 // pred_region
          %s352 = sand.u32 %s24, 1
          %s353 = scalar_lea.sflag [#allocation10], %s352
          %s354 = sand.u32 %s107, 1
          %s355 = smul.addr %s354, 2
          %s356 = scalar_lea.vmem [#allocation9], %s355
          %s357 = smul.u32 2, %s24
          %359 = vsyncadd %s353, 0
          %s360 = scalar_lea.hbm %s3, %s357
          %s362 = sshll.u32 %s360, 4
          %s363 = int_to_ptr.hbm [resolvable:$true] %s362
          %s364 = sshll.u32 %s356, 4
          %s365 = int_to_ptr.vmem [resolvable:$true] %s364
          %367 = dma.hbm_to_vmem [thread:$0]  %s363, 32, %s365, %s353
        $region48: #{tpu_custom_call.1} parent=35 // pred_fallthru
          _
        // Predicated region
        $region49: #{tpu_custom_call.1} parent=35 // pred_check
          %p368 = pneg %p143
        $region50: #{tpu_custom_call.1} parent=35 // pred_check_branch
          %370 = sbr.rel (%p368) target = $region52
        $region51: #{tpu_custom_call.1} parent=35 // pred_region
          %s371 = sand.u32 %s24, 1
          %s372 = scalar_lea.sflag [#allocation10], %s371
          %s373 = sand.u32 %s133, 1
          %s374 = smul.addr %s373, 128
          %s375 = scalar_lea.vmem [#allocation11], %s374
          %s376 = smul.u32 32, %s24
          %378 = vsyncadd %s372, 0
          %s379 = smul.addr %s376, 4
          %s380 = scalar_lea.hbm %s4, %s379
          %s381 = sshll.u32 %s380, 4
          %s382 = int_to_ptr.hbm [resolvable:$true] %s381
          %s383 = sshll.u32 %s375, 4
          %s384 = int_to_ptr.vmem [resolvable:$true] %s383
          %389 = dma.hbm_to_vmem [thread:$0]  %s382, 2048, %s384, %s372, 64, 64, 4
        $region52: #{tpu_custom_call.1} parent=35 // pred_fallthru
          _
      $region36: #{tpu_custom_call.1} parent=5 // pred_fallthru
        _
      %p390 = scmp.le.s32.totalorder 1, %s24
      %p391 = scmp.lt.s32.totalorder %s24, 5
      %p392 = pnand %p390, %p391
      %p393 = pneg %p392
      // Predicated region
      $region53: #{tpu_custom_call.1} parent=5 // pred_check
        _
      $region54: #{tpu_custom_call.1} parent=5 // pred_check_branch
        %395 = sbr.rel (%p392) target = $region56
      $region55: #{tpu_custom_call.1} parent=5 // pred_region
        %s396 = ssub.s32 %s24, 1
        // Predicated region
        $region57: #{tpu_custom_call.1} parent=55 // pred_check
          %p397 = pneg %p45
        $region58: #{tpu_custom_call.1} parent=55 // pred_check_branch
          %399 = sbr.rel (%p397) target = $region60
        $region59: #{tpu_custom_call.1} parent=55 // pred_region
          %401 = dma.done [#allocation4], 128
        $region60: #{tpu_custom_call.1} parent=55 // pred_fallthru
          _
        %s402 = sand.u32 %s29, 1
        %s403 = scalar_lea.sflag [#allocation7], %s402
        %s404 = sand.u32 %s58, 1
        %s405 = smul.addr %s404, 32
        %s406 = scalar_lea.vmem [#allocation6], %s405
        // Predicated region
        $region61: #{tpu_custom_call.1} parent=55 // pred_check
          %p407 = pneg %p71
        $region62: #{tpu_custom_call.1} parent=55 // pred_check_branch
          %409 = sbr.rel (%p407) target = $region64
        $region63: #{tpu_custom_call.1} parent=55 // pred_region
          %411 = dma.done %s403, 512
        $region64: #{tpu_custom_call.1} parent=55 // pred_fallthru
          _
        %s412 = sand.u32 %s29, 1
        %s413 = scalar_lea.sflag [#allocation7], %s412
        %s414 = sand.u32 %s84, 1
        %s415 = smul.addr %s414, 2
        %s416 = scalar_lea.vmem [#allocation8], %s415
        // Predicated region
        $region65: #{tpu_custom_call.1} parent=55 // pred_check
          %p417 = pneg %p97
        $region66: #{tpu_custom_call.1} parent=55 // pred_check_branch
          %419 = sbr.rel (%p417) target = $region68
        $region67: #{tpu_custom_call.1} parent=55 // pred_region
          %421 = dma.done %s413, 32
        $region68: #{tpu_custom_call.1} parent=55 // pred_fallthru
          _
        %s422 = sand.u32 %s29, 1
        %s423 = scalar_lea.sflag [#allocation10], %s422
        %s424 = sand.u32 %s110, 1
        %s425 = smul.addr %s424, 2
        %s426 = scalar_lea.vmem [#allocation9], %s425
        // Predicated region
        $region69: #{tpu_custom_call.1} parent=55 // pred_check
          %p427 = pneg %p123
        $region70: #{tpu_custom_call.1} parent=55 // pred_check_branch
          %429 = sbr.rel (%p427) target = $region72
        $region71: #{tpu_custom_call.1} parent=55 // pred_region
          %431 = dma.done %s423, 32
        $region72: #{tpu_custom_call.1} parent=55 // pred_fallthru
          _
        %s432 = sand.u32 %s29, 1
        %s433 = scalar_lea.sflag [#allocation10], %s432
        %s434 = sand.u32 %s136, 1
        %s435 = smul.addr %s434, 128
        %s436 = scalar_lea.vmem [#allocation11], %s435
        // Predicated region
        $region73: #{tpu_custom_call.1} parent=55 // pred_check
          %p437 = pneg %p149
        $region74: #{tpu_custom_call.1} parent=55 // pred_check_branch
          %439 = sbr.rel (%p437) target = $region76
        $region75: #{tpu_custom_call.1} parent=55 // pred_region
          %441 = dma.done %s433, 2048
        $region76: #{tpu_custom_call.1} parent=55 // pred_fallthru
          _
        // Predicated region
        $region77: #{tpu_custom_call.1} parent=55 // pred_check
          %p442 = pneg %p212
        $region78: #{tpu_custom_call.1} parent=55 // pred_check_branch
          %444 = sbr.rel (%p442) target = $region80
        $region79: #{tpu_custom_call.1} parent=55 // pred_region
          %446 = dma.done [#allocation13], 1024
        $region80: #{tpu_custom_call.1} parent=55 // pred_fallthru
          _
        %p447 = pneg %p45
        %p448 = pneg %p42
        %s449 = sand.u32 %s29, 1
        %s450 = scalar_lea.sflag [#allocation7], %s449
        %s451 = sand.u32 %s58, 1
        %s452 = smul.addr %s451, 32
        %s453 = scalar_lea.vmem [#allocation6], %s452
        %p454 = pneg %p71
        %p455 = pneg %p68
        %s456 = sand.u32 %s29, 1
        %s457 = scalar_lea.sflag [#allocation7], %s456
        %s458 = sand.u32 %s84, 1
        %s459 = smul.addr %s458, 2
        %s460 = scalar_lea.vmem [#allocation8], %s459
        %p461 = pneg %p97
        %p462 = pneg %p94
        %s463 = sand.u32 %s29, 1
        %s464 = scalar_lea.sflag [#allocation10], %s463
        %s465 = sand.u32 %s110, 1
        %s466 = smul.addr %s465, 2
        %s467 = scalar_lea.vmem [#allocation9], %s466
        %p468 = pneg %p123
        %p469 = pneg %p120
        %s470 = sand.u32 %s29, 1
        %s471 = scalar_lea.sflag [#allocation10], %s470
        %s472 = sand.u32 %s136, 1
        %s473 = smul.addr %s472, 128
        %s474 = scalar_lea.vmem [#allocation11], %s473
        %p475 = pneg %p149
        %p476 = pneg %p146
        %p477 = pneg %p170
        %p478 = pneg %p167
        %p479 = pneg %p191
        %p480 = pneg %p188
        %p481 = pneg %p212
        %p482 = pneg %p209
        %p483 = pneg %p233
        %p484 = pneg %p230
        %p485 = pneg %p254
        %p486 = pneg %p251
        %s487 = smul.u32 2, %s29
        %s488 = smul.u32 2, %s29
        %s489 = smul.u32 2, %s29
        %s490 = smul.u32 32, %s29
        %p492 = scmp.eq.s32.totalorder %s29, 0
        // Predicated region
        $region81: #{tpu_custom_call.1} parent=55 // pred_check
          %p493 = pneg %p492
        $region82: #{tpu_custom_call.1} parent=55 // pred_check_branch
          %495 = sbr.rel (%p493) target = $region84
        $region83: #{tpu_custom_call.1} parent=55 // pred_region
          %496 = vst [vmem:[#allocation2] sm:$0xff] 0.0
        $region84: #{tpu_custom_call.1} parent=55 // pred_fallthru
          _
        %v497 = vld [vmem:[#allocation3] sm:$0xff]
        %v498 = vpack.c.bf16 %v497, %v497
        %v499 = vld [vmem:[%s406] sm:$0xff]
        %v500 = vld [vmem:[%s406 + $0x8] sm:$0xff]
        %v501 = vld [vmem:[%s406 + $0x10] sm:$0xff]
        %v502 = vld [vmem:[%s406 + $0x18] sm:$0xff]
        %v507 = vunpack.c.l.b16 %v499
        %v508 = vunpack.c.h.b16 %v499
        %v509 = vunpack.c.l.b16 %v500
        %v510 = vunpack.c.h.b16 %v500
        %v511 = vunpack.c.l.b16 %v501
        %v512 = vunpack.c.h.b16 %v501
        %v513 = vunpack.c.l.b16 %v502
        %v514 = vunpack.c.h.b16 %v502
        %v515 = vpack.c.b16 %v509, %v507
        %v516 = vpack.c.b16 %v510, %v508
        %v517 = vpack.c.b16 %v513, %v511
        %v518 = vpack.c.b16 %v514, %v512
        %vm523 = vcmask 261120
        %v525 = vsel %vm523, %v498, 0
        %527 = vmatpush.bf16.msra.mxu0 0
        %528 = vmatpush.bf16.msra.mxu0 0
        %529 = vmatpush.bf16.msra.mxu0 0
        %530 = vmatpush.bf16.msra.mxu0 0
        %531 = vmatpush.bf16.msra.mxu0 0
        %532 = vmatpush.bf16.msra.mxu0 0
        %533 = vmatpush.bf16.msra.mxu0 %v517
        %534 = vmatpush.bf16.msra.mxu0 %v515
        %535 = vmatmul.bf16.gmra.mxu0 %v525
        %v536 = vpop.f32.mrf.mxu0
        %v537 = vadd.f32 0.0, %v536
        %v538 = vpop.f32.mrf.mxu0
        %539 = vdwg.mxu0
        %540 = vmatpush.bf16.msra.mxu0 0
        %541 = vmatpush.bf16.msra.mxu0 0
        %542 = vmatpush.bf16.msra.mxu0 0
        %543 = vmatpush.bf16.msra.mxu0 0
        %544 = vmatpush.bf16.msra.mxu0 0
        %545 = vmatpush.bf16.msra.mxu0 0
        %546 = vmatpush.bf16.msra.mxu0 %v518
        %547 = vmatpush.bf16.msra.mxu0 %v516
        %548 = vmatmul.bf16.gmra.mxu0 %v525
        %v549 = vpop.f32.mrf.mxu0
        %v550 = vadd.f32 0.0, %v549
        %v551 = vpop.f32.mrf.mxu0
        %552 = vdwg.mxu0
        %v553 = vld [vmem:[%s416] sm:$0x3]
        %v554 = vld [vmem:[%s426] sm:$0x3]
        %v555 = vrot.slane %v537, 4
        %v556 = vadd.f32 %v537, %v555
        %v557 = vrot.slane %v556, 2
        %v558 = vadd.f32 %v556, %v557
        %v559 = vrot.slane %v558, 1
        %v560 = vadd.f32 %v558, %v559
        %v561 = vrot.slane %v550, 4
        %v562 = vadd.f32 %v550, %v561
        %v563 = vrot.slane %v562, 2
        %v564 = vadd.f32 %v562, %v563
        %v565 = vrot.slane %v564, 1
        %v566 = vadd.f32 %v564, %v565
        %v567 = vmul.f32 %v560, 0.125
        %v568 = vmul.f32 %v566, 0.125
        %v569 = vmul.f32 %v537, %v537
        %v570 = vmul.f32 %v550, %v550
        %v571 = vrot.slane %v569, 4
        %v572 = vadd.f32 %v569, %v571
        %v573 = vrot.slane %v572, 2
        %v574 = vadd.f32 %v572, %v573
        %v575 = vrot.slane %v574, 1
        %v576 = vadd.f32 %v574, %v575
        %v577 = vrot.slane %v570, 4
        %v578 = vadd.f32 %v570, %v577
        %v579 = vrot.slane %v578, 2
        %v580 = vadd.f32 %v578, %v579
        %v581 = vrot.slane %v580, 1
        %v582 = vadd.f32 %v580, %v581
        %v583 = vmul.f32 %v576, 0.125
        %v584 = vmul.f32 %v582, 0.125
        %v585 = vmul.f32 %v567, %v567
        %v586 = vmul.f32 %v568, %v568
        %v587 = vsub.f32 %v583, %v585
        %v588 = vsub.f32 %v584, %v586
        %v589 = vadd.f32 %v587, 1e-05
        %v590 = vadd.f32 %v588, 1e-05
        %v591 = vrsqrt.pop %v589
        %v592 = vmul.f32 %v591, %v589
        %v593 = vmul.f32 %v592, %v591
        %v594 = vmul.f32 0.5, %v593
        %v595 = vsub.f32 1.5, %v594
        %v596 = vmul.f32 %v591, %v595
        %vm597 = vweird.f32 %v589
        %vm598 = vweird.f32 %v591
        %vm599 = vmor %vm597, %vm598
        %v600 = vsel %vm599, %v591, %v596
        %v601 = vrsqrt.pop %v590
        %v602 = vmul.f32 %v601, %v590
        %v603 = vmul.f32 %v602, %v601
        %v604 = vmul.f32 0.5, %v603
        %v605 = vsub.f32 1.5, %v604
        %v606 = vmul.f32 %v601, %v605
        %vm607 = vweird.f32 %v590
        %vm608 = vweird.f32 %v601
        %vm609 = vmor %vm607, %vm608
        %v610 = vsel %vm609, %v601, %v606
        %v613 = vrot.slane %v610, 7
        %vm614 = vcmask 1040384
        %v615 = vsel %vm614, %v600, %v613
        %v617 = vmul.f32 %v553, %v615
        %v619 = vperm.slane %v617, 0
        %v620 = vperm.slane %v617, 1
        %v623 = vmul.f32 %v567, %v619
        %v624 = vmul.f32 %v568, %v620
        %v627 = vrot.slane %v624, 7
        %v628 = vsel %vm614, %v623, %v627
        %v630 = vsub.f32 %v554, %v628
        %v631 = vmul.f32 %v537, %v619
        %v632 = vmul.f32 %v550, %v620
        %v634 = vperm.slane %v630, 0
        %v635 = vperm.slane %v630, 1
        %v638 = vadd.f32 %v631, %v634
        %v639 = vadd.f32 %v632, %v635
        %v640 = vmul.f32 %v638, 0.2
        %v641 = vmul.f32 %v639, 0.2
        %v642 = vmax.f32 %v638, %v640
        %v643 = vmax.f32 %v639, %v641
        %v644 = vld [vmem:[#allocation2] sm:$0xff]
        %v645 = vpack.c.bf16 %v642, %v642
        %v646 = vpack.c.bf16 %v643, %v643
        %v647 = vld [vmem:[%s436] sm:$0xf]
        %v648 = vld [vmem:[%s436 + $0x4] sm:$0xf]
        %v649 = vld [vmem:[%s436 + $0x8] sm:$0xf]
        %v650 = vld [vmem:[%s436 + $0xc] sm:$0xf]
        %v651 = vld [vmem:[%s436 + $0x10] sm:$0xf]
        %v652 = vld [vmem:[%s436 + $0x14] sm:$0xf]
        %v653 = vld [vmem:[%s436 + $0x18] sm:$0xf]
        %v654 = vld [vmem:[%s436 + $0x1c] sm:$0xf]
        %v655 = vld [vmem:[%s436 + $0x20] sm:$0xf]
        %v656 = vld [vmem:[%s436 + $0x24] sm:$0xf]
        %v657 = vld [vmem:[%s436 + $0x28] sm:$0xf]
        %v658 = vld [vmem:[%s436 + $0x2c] sm:$0xf]
        %v659 = vld [vmem:[%s436 + $0x30] sm:$0xf]
        %v660 = vld [vmem:[%s436 + $0x34] sm:$0xf]
        %v661 = vld [vmem:[%s436 + $0x38] sm:$0xf]
        %v662 = vld [vmem:[%s436 + $0x3c] sm:$0xf]
        %v663 = vld [vmem:[%s436 + $0x40] sm:$0xf]
        %v664 = vld [vmem:[%s436 + $0x44] sm:$0xf]
        %v665 = vld [vmem:[%s436 + $0x48] sm:$0xf]
        %v666 = vld [vmem:[%s436 + $0x4c] sm:$0xf]
        %v667 = vld [vmem:[%s436 + $0x50] sm:$0xf]
        %v668 = vld [vmem:[%s436 + $0x54] sm:$0xf]
        %v669 = vld [vmem:[%s436 + $0x58] sm:$0xf]
        %v670 = vld [vmem:[%s436 + $0x5c] sm:$0xf]
        %v671 = vld [vmem:[%s436 + $0x60] sm:$0xf]
        %v672 = vld [vmem:[%s436 + $0x64] sm:$0xf]
        %v673 = vld [vmem:[%s436 + $0x68] sm:$0xf]
        %v674 = vld [vmem:[%s436 + $0x6c] sm:$0xf]
        %v675 = vld [vmem:[%s436 + $0x70] sm:$0xf]
        %v676 = vld [vmem:[%s436 + $0x74] sm:$0xf]
        %v677 = vld [vmem:[%s436 + $0x78] sm:$0xf]
        %v678 = vld [vmem:[%s436 + $0x7c] sm:$0xf]
        %v711 = vunpack.c.l.b16 %v647
        %v712 = vunpack.c.l.b16 %v648
        %v713 = vunpack.c.l.b16 %v649
        %v714 = vunpack.c.l.b16 %v650
        %v715 = vunpack.c.l.b16 %v651
        %v716 = vunpack.c.l.b16 %v652
        %v717 = vunpack.c.l.b16 %v653
        %v718 = vunpack.c.l.b16 %v654
        %v719 = vunpack.c.l.b16 %v655
        %v720 = vunpack.c.l.b16 %v656
        %v721 = vunpack.c.l.b16 %v657
        %v722 = vunpack.c.l.b16 %v658
        %v723 = vunpack.c.l.b16 %v659
        %v724 = vunpack.c.l.b16 %v660
        %v725 = vunpack.c.l.b16 %v661
        %v726 = vunpack.c.l.b16 %v662
        %v727 = vunpack.c.l.b16 %v663
        %v728 = vunpack.c.l.b16 %v664
        %v729 = vunpack.c.l.b16 %v665
        %v730 = vunpack.c.l.b16 %v666
        %v731 = vunpack.c.l.b16 %v667
        %v732 = vunpack.c.l.b16 %v668
        %v733 = vunpack.c.l.b16 %v669
        %v734 = vunpack.c.l.b16 %v670
        %v735 = vunpack.c.l.b16 %v671
        %v736 = vunpack.c.l.b16 %v672
        %v737 = vunpack.c.l.b16 %v673
        %v738 = vunpack.c.l.b16 %v674
        %v739 = vunpack.c.l.b16 %v675
        %v740 = vunpack.c.l.b16 %v676
        %v741 = vunpack.c.l.b16 %v677
        %v742 = vunpack.c.l.b16 %v678
        %v743 = vpack.c.b16 %v712, %v711
        %v744 = vpack.c.b16 %v714, %v713
        %v745 = vpack.c.b16 %v716, %v715
        %v746 = vpack.c.b16 %v718, %v717
        %v747 = vpack.c.b16 %v720, %v719
        %v748 = vpack.c.b16 %v722, %v721
        %v749 = vpack.c.b16 %v724, %v723
        %v750 = vpack.c.b16 %v726, %v725
        %v751 = vpack.c.b16 %v728, %v727
        %v752 = vpack.c.b16 %v730, %v729
        %v753 = vpack.c.b16 %v732, %v731
        %v754 = vpack.c.b16 %v734, %v733
        %v755 = vpack.c.b16 %v736, %v735
        %v756 = vpack.c.b16 %v738, %v737
        %v757 = vpack.c.b16 %v740, %v739
        %v758 = vpack.c.b16 %v742, %v741
        %775 = vmatpush.bf16.msra.mxu0 %v750
        %776 = vmatpush.bf16.msra.mxu0 %v749
        %777 = vmatpush.bf16.msra.mxu0 %v748
        %778 = vmatpush.bf16.msra.mxu0 %v747
        %779 = vmatpush.bf16.msra.mxu0 %v746
        %780 = vmatpush.bf16.msra.mxu0 %v745
        %781 = vmatpush.bf16.msra.mxu0 %v744
        %782 = vmatpush.bf16.msra.mxu0 %v743
        %783 = vmatmul.bf16.gmra.mxu0 %v645
        %v784 = vpop.f32.mrf.mxu0
        %v785 = vadd.f32 0.0, %v784
        %v786 = vpop.f32.mrf.mxu0
        %787 = vdwg.mxu0
        %788 = vmatpush.bf16.msra.mxu0 %v758
        %789 = vmatpush.bf16.msra.mxu0 %v757
        %790 = vmatpush.bf16.msra.mxu0 %v756
        %791 = vmatpush.bf16.msra.mxu0 %v755
        %792 = vmatpush.bf16.msra.mxu0 %v754
        %793 = vmatpush.bf16.msra.mxu0 %v753
        %794 = vmatpush.bf16.msra.mxu0 %v752
        %795 = vmatpush.bf16.msra.mxu0 %v751
        %796 = vmatmul.bf16.gmra.mxu0 %v646
        %v797 = vpop.f32.mrf.mxu0
        %v798 = vadd.f32 %v785, %v797
        %v799 = vpop.f32.mrf.mxu0
        %800 = vdwg.mxu0
        %v801 = vadd.f32 %v644, %v798
        %802 = vst [vmem:[#allocation2] sm:$0xff] %v801
        %p803 = scmp.eq.s32.totalorder %s29, 3
        // Predicated region
        $region85: #{tpu_custom_call.1} parent=55 // pred_check
          %p804 = pneg %p803
        $region86: #{tpu_custom_call.1} parent=55 // pred_check_branch
          %806 = sbr.rel (%p804) target = $region88
        $region87: #{tpu_custom_call.1} parent=55 // pred_region
          %v807 = vld [vmem:[#allocation2] sm:$0xff]
          %v808 = vld [vmem:[%s5] sm:$0x1]
          %v809 = vld [vmem:[%s6] sm:$0x1]
          %v810 = vrot.slane %v807, 4
          %v811 = vadd.f32 %v807, %v810
          %v812 = vrot.slane %v811, 2
          %v813 = vadd.f32 %v811, %v812
          %v814 = vrot.slane %v813, 1
          %v815 = vadd.f32 %v813, %v814
          %v816 = vmul.f32 %v815, 0.125
          %v817 = vmul.f32 %v807, %v807
          %v818 = vrot.slane %v817, 4
          %v819 = vadd.f32 %v817, %v818
          %v820 = vrot.slane %v819, 2
          %v821 = vadd.f32 %v819, %v820
          %v822 = vrot.slane %v821, 1
          %v823 = vadd.f32 %v821, %v822
          %v824 = vmul.f32 %v823, 0.125
          %v825 = vmul.f32 %v816, %v816
          %v826 = vsub.f32 %v824, %v825
          %v827 = vadd.f32 %v826, 1e-05
          %v828 = vrsqrt.pop %v827
          %v829 = vmul.f32 %v828, %v827
          %v830 = vmul.f32 %v829, %v828
          %v831 = vmul.f32 0.5, %v830
          %v832 = vsub.f32 1.5, %v831
          %v833 = vmul.f32 %v828, %v832
          %vm834 = vweird.f32 %v827
          %vm835 = vweird.f32 %v828
          %vm836 = vmor %vm834, %vm835
          %v837 = vsel %vm836, %v828, %v833
          %v838 = vmul.f32 %v808, %v837
          %v839 = vmul.f32 %v816, %v838
          %v840 = vsub.f32 %v809, %v839
          %v842 = vperm.slane %v838, 0
          %v844 = vmul.f32 %v807, %v842
          %v846 = vperm.slane %v840, 0
          %v848 = vadd.f32 %v844, %v846
          %v849 = vmul.f32 %v848, 0.2
          %v850 = vmax.f32 %v848, %v849
          %v851 = vpack.c.bf16 %v850, %v850
          %v852 = vld [vmem:[#allocation12] sm:$0xf]
          %v853 = vld [vmem:[#allocation12 + $0x4] sm:$0xf]
          %v854 = vld [vmem:[#allocation12 + $0x8] sm:$0xf]
          %v855 = vld [vmem:[#allocation12 + $0xc] sm:$0xf]
          %v856 = vld [vmem:[#allocation12 + $0x10] sm:$0xf]
          %v857 = vld [vmem:[#allocation12 + $0x14] sm:$0xf]
          %v858 = vld [vmem:[#allocation12 + $0x18] sm:$0xf]
          %v859 = vld [vmem:[#allocation12 + $0x1c] sm:$0xf]
          %v860 = vld [vmem:[#allocation12 + $0x20] sm:$0xf]
          %v861 = vld [vmem:[#allocation12 + $0x24] sm:$0xf]
          %v862 = vld [vmem:[#allocation12 + $0x28] sm:$0xf]
          %v863 = vld [vmem:[#allocation12 + $0x2c] sm:$0xf]
          %v864 = vld [vmem:[#allocation12 + $0x30] sm:$0xf]
          %v865 = vld [vmem:[#allocation12 + $0x34] sm:$0xf]
          %v866 = vld [vmem:[#allocation12 + $0x38] sm:$0xf]
          %v867 = vld [vmem:[#allocation12 + $0x3c] sm:$0xf]
          %v868 = vld [vmem:[%s8] sm:$0x1]
          %v870 = vperm.slane %v868, 0
          %v888 = vunpack.c.l.b16 %v852
          %v889 = vunpack.c.l.b16 %v853
          %v890 = vunpack.c.l.b16 %v854
          %v891 = vunpack.c.l.b16 %v855
          %v892 = vunpack.c.l.b16 %v856
          %v893 = vunpack.c.l.b16 %v857
          %v894 = vunpack.c.l.b16 %v858
          %v895 = vunpack.c.l.b16 %v859
          %v896 = vunpack.c.l.b16 %v860
          %v897 = vunpack.c.l.b16 %v861
          %v898 = vunpack.c.l.b16 %v862
          %v899 = vunpack.c.l.b16 %v863
          %v900 = vunpack.c.l.b16 %v864
          %v901 = vunpack.c.l.b16 %v865
          %v902 = vunpack.c.l.b16 %v866
          %v903 = vunpack.c.l.b16 %v867
          %v904 = vpack.c.b16 %v889, %v888
          %v905 = vpack.c.b16 %v891, %v890
          %v906 = vpack.c.b16 %v893, %v892
          %v907 = vpack.c.b16 %v895, %v894
          %v908 = vpack.c.b16 %v897, %v896
          %v909 = vpack.c.b16 %v899, %v898
          %v910 = vpack.c.b16 %v901, %v900
          %v911 = vpack.c.b16 %v903, %v902
          %920 = vmatpush.bf16.msra.mxu0 %v911
          %921 = vmatpush.bf16.msra.mxu0 %v910
          %922 = vmatpush.bf16.msra.mxu0 %v909
          %923 = vmatpush.bf16.msra.mxu0 %v908
          %924 = vmatpush.bf16.msra.mxu0 %v907
          %925 = vmatpush.bf16.msra.mxu0 %v906
          %926 = vmatpush.bf16.msra.mxu0 %v905
          %927 = vmatpush.bf16.msra.mxu0 %v904
          %928 = vmatmul.bf16.gmra.mxu0 %v851
          %v929 = vpop.f32.mrf.mxu0
          %v930 = vadd.f32 %v870, %v929
          %v931 = vpop.f32.mrf.mxu0
          %932 = vdwg.mxu0
          %933 = vst [vmem:[#allocation14] sm:$0xff] %v930
        $region88: #{tpu_custom_call.1} parent=55 // pred_fallthru
          _
        // Predicated region
        $region89: #{tpu_custom_call.1} parent=55 // pred_check
          %p934 = pneg %p251
        $region90: #{tpu_custom_call.1} parent=55 // pred_check_branch
          %936 = sbr.rel (%p934) target = $region92
        $region91: #{tpu_custom_call.1} parent=55 // pred_region
          %938 = vsyncadd [#allocation5], 0
          %s940 = sshll.u32 [#allocation14], 4
          %s941 = int_to_ptr.vmem [resolvable:$true] %s940
          %s942 = sshll.u32 %s9, 4
          %s943 = int_to_ptr.hbm [resolvable:$true] %s942
          %945 = dma.vmem_to_hbm [thread:$0]  %s941, 128, %s943, [#allocation5]
        $region92: #{tpu_custom_call.1} parent=55 // pred_fallthru
          _
        // Predicated region
        $region93: #{tpu_custom_call.1} parent=55 // pred_check
          %p946 = pneg %p251
        $region94: #{tpu_custom_call.1} parent=55 // pred_check_branch
          %948 = sbr.rel (%p946) target = $region96
        $region95: #{tpu_custom_call.1} parent=55 // pred_region
          %950 = dma.done [#allocation5], 128
        $region96: #{tpu_custom_call.1} parent=55 // pred_fallthru
          _
      $region56: #{tpu_custom_call.1} parent=5 // pred_fallthru
        _
      %p951 = scmp.le.s32.totalorder 2, %s24
      // Predicated region
      $region97: #{tpu_custom_call.1} parent=5 // pred_check
        %p952 = pneg %p951
      $region98: #{tpu_custom_call.1} parent=5 // pred_check_branch
        %954 = sbr.rel (%p952) target = $region100
      $region99: #{tpu_custom_call.1} parent=5 // pred_region
        %s955 = ssub.s32 %s24, 2
      $region100: #{tpu_custom_call.1} parent=5 // pred_fallthru
        _
    $region6: #{tpu_custom_call.1} parent=1 // loop_footer
      %s28 = sadd.s32 1, %s24
    $region7: #{tpu_custom_call.1} parent=1 // loop_footer_branch
      %23 = sbr.rel target = $region3
    $region8: #{tpu_custom_call.1} parent=1 // loop_exit
      _
    %956 = vsyncpa [#allocation4], 1
    %s957 = scalar_lea.sflag [#allocation4], 1
    %958 = vsyncpa %s957, 1
    %959 = vsyncpa [#allocation7], 1
    %s960 = scalar_lea.sflag [#allocation7], 1
    %961 = vsyncpa %s960, 1
    %962 = vsyncpa [#allocation10], 1
    %s963 = scalar_lea.sflag [#allocation10], 1
    %964 = vsyncpa %s963, 1
    %965 = vsyncpa [#allocation13], 1
    %966 = vsyncpa [#allocation5], 1
    %s967 = scalar_lea.sflag [#allocation5], 1
    %968 = vsyncpa %s967, 1

</llo_original>
